<compile_context>
chip_gen: v7x
topology: tpu7x:2x2x1
jax: 0.10.0
libtpu: 0.0.40
codegen_flags: <defaults>
</compile_context>

<pallas_src>
import functools

import jax
import jax.numpy as jnp
from jax.experimental import pallas as pl
from jax.experimental.pallas import tpu as pltpu


def _round_up(x: int, m: int) -> int:
    return (x + m - 1) // m * m


def _wordemb_kernel(ids_ref, table_ref, out_ref):
    # ids_ref:   (TB, 2)   int32  col 0 = object id, col 1 = subject id
    # table_ref: (Vp, D)   f32    whole padded table, VMEM-resident (constant index_map)
    # out_ref:   (TB, 2*D) f32    final layout: obj emb in [:, :D], sub emb in [:, D:]
    ids = ids_ref[...]                     # (TB, 2)
    tbl = table_ref[...]                   # (Vp, D)
    tb = ids.shape[0]
    vp, _ = tbl.shape

    # Fused one-hot gather: stack obj ids over sub ids along the M axis and do
    # a SINGLE MXU matmul (one push/drain instead of two).
    stacked_ids = jnp.concatenate([ids[:, 0:1], ids[:, 1:2]], axis=0)   # (2*TB, 1)
    lanes = jax.lax.broadcasted_iota(jnp.int32, (2 * tb, vp), 1)        # (2*TB, Vp)
    onehot = (lanes == stacked_ids).astype(tbl.dtype)                   # (2*TB, Vp)

    # HIGHEST precision: exact 0/1 weights x residual-split f32 table rows
    # reproduce the table values exactly in the f32 accumulator.
    rows = jnp.dot(onehot, tbl, preferred_element_type=jnp.float32,
                   precision=jax.lax.Precision.HIGHEST)                 # (2*TB, D)

    # Emit the module's output layout directly: [obj_emb | sub_emb].
    out_ref[...] = jnp.concatenate([rows[:tb, :], rows[tb:, :]], axis=1)


def prepare_table(table: jax.Array, *, vocab_align: int = 128) -> jax.Array:
    """One-time parameter prep (NOT per call): cast to f32 and pad the vocab
    axis to a multiple of 128 so the in-kernel one-hot is lane-dense."""
    V, D = table.shape
    Vp = _round_up(V, vocab_align)
    return jnp.zeros((Vp, D), jnp.float32).at[:V, :].set(table.astype(jnp.float32))


@functools.partial(jax.jit, static_argnames=("max_single_tile", "tile"))
def word_emb(obj_ids: jax.Array, sub_ids: jax.Array, table_p: jax.Array,
             *, max_single_tile: int = 512, tile: int = 512) -> jax.Array:
    """table_p[obj_ids] ++ table_p[sub_ids] along axis=1 -> [B, 2*D] float32."""
    assert obj_ids.shape == sub_ids.shape and obj_ids.ndim == 1
    B = obj_ids.shape[0]
    Vp, D = table_p.shape

    # Per-call input prep is just an ids stack (+ optional row pad).
    ids = jnp.stack([obj_ids.astype(jnp.int32), sub_ids.astype(jnp.int32)], axis=1)

    if B <= max_single_tile:
        tb, Bp = B, B                          # single grid step, no batch padding
    else:
        tb = _round_up(tile, 8)                # sublane-aligned batch tile
        Bp = _round_up(B, tb)                  # grid >= 2 -> shards across v7x's 2 TCs
        ids = jnp.pad(ids, ((0, Bp - B), (0, 0)))   # pad rows gather row 0, sliced off
    grid = (Bp // tb,)

    cost = pl.CostEstimate(
        flops=2 * (2 * Bp) * Vp * D,           # one fused (2B, Vp) x (Vp, D) matmul
        transcendentals=0,
        bytes_accessed=table_p.size * 4 + ids.size * 4 + Bp * 2 * D * 4,
    )

    out = pl.pallas_call(
        _wordemb_kernel,
        out_shape=jax.ShapeDtypeStruct((Bp, 2 * D), jnp.float32),
        grid_spec=pltpu.PrefetchScalarGridSpec(
            num_scalar_prefetch=0,
            grid=grid,
            in_specs=[
                # batch tile of stacked [obj, sub] indices
                pl.BlockSpec((tb, 2), lambda i: (i, 0)),
                # whole padded table, constant index_map -> fetched once, VMEM-resident
                pl.BlockSpec((Vp, D), lambda i: (0, 0)),
            ],
            out_specs=pl.BlockSpec((tb, 2 * D), lambda i: (i, 0)),
        ),
        compiler_params=pltpu.CompilerParams(
            dimension_semantics=("parallel",),   # rows independent; both v7x TCs when grid >= 2
        ),
        cost_estimate=cost,
    )(ids, table_p)

    # Only a contiguous row-slice (and only if the batch was padded); no
    # feature-axis repack.
    return out if Bp == B else out[:B]


if __name__ == "__main__":
    key = jax.random.PRNGKey(0)
    k_table, k_obj, k_sub = jax.random.split(key, 3)

    V, D, B = 32, 100, 20   # small category vocab, GloVe-100d-like dim, 20 pairs

    # Synthetic "GloVe" table (stands in for the csv load); prepared ONCE at init.
    glove = jax.random.normal(k_table, (V, D), dtype=jnp.float32)
    table_p = jax.block_until_ready(prepare_table(glove))

    # Category indices (stand in for the dataframe string->row lookup).
    obj_ids = jax.random.randint(k_obj, (B,), 0, V, dtype=jnp.int32)
    sub_ids = jax.random.randint(k_sub, (B,), 0, V, dtype=jnp.int32)

    # Pure-JAX reference: embs = concat([obj_emb, sub_emb], axis=1).
    ref = jnp.concatenate([glove[obj_ids], glove[sub_ids]], axis=1)

    # Default path: single grid step, no batch padding, no wrapper epilogue.
    out = jax.block_until_ready(word_emb(obj_ids, sub_ids, table_p))
    assert out.shape == (B, 2 * D) and out.dtype == jnp.float32, out.shape
    assert jnp.allclose(out, ref, atol=1e-5), "single-step path mismatch"

    # Tiled path (exercises batch padding 20->24, grid=(3,), and the row-slice).
    out_t = jax.block_until_ready(
        word_emb(obj_ids, sub_ids, table_p, max_single_tile=8, tile=8))
    assert out_t.shape == (B, 2 * D)
    assert jnp.allclose(out_t, ref, atol=1e-5), "tiled path mismatch"

    print("KERNEL_OK")
</pallas_src>

<mosaic_0001>
module attributes {stable_mosaic.version = 11 : i64} {
  func.func @_wordemb_kernel(%arg0: i32, %arg1: memref<20x2xi32, #tpu.memory_space<vmem>>, %arg2: memref<128x100xf32, #tpu.memory_space<vmem>>, %arg3: memref<20x200xf32, #tpu.memory_space<vmem>>) attributes {dimension_semantics = [#tpu.dimension_semantics<parallel>], iteration_bounds = array<i64: 1>, scalar_prefetch = 0 : i64, scratch_operands = 0 : i64, tpu.core_type = #tpu.core_type<tc>, window_params = [{transform_indices = @transform_0, window_bounds = array<i64: 20, 2>}, {pipeline_mode = #tpu.pipeline_mode<synchronous>, transform_indices = @transform_1, window_bounds = array<i64: 128, 100>}, {transform_indices = @transform_2, window_bounds = array<i64: 20, 200>}]} {
    %c0 = arith.constant 0 : index
    %c0_0 = arith.constant 0 : index
    %0 = vector.load %arg1[%c0, %c0_0] : memref<20x2xi32, #tpu.memory_space<vmem>>, vector<20x2xi32>
    %c0_1 = arith.constant 0 : index
    %c0_2 = arith.constant 0 : index
    %1 = vector.load %arg2[%c0_1, %c0_2] : memref<128x100xf32, #tpu.memory_space<vmem>>, vector<128x100xf32>
    %2 = vector.extract_strided_slice %0 {offsets = [0, 0], sizes = [20, 1], strides = [1, 1]} : vector<20x2xi32> to vector<20x1xi32>
    %3 = vector.extract_strided_slice %0 {offsets = [0, 1], sizes = [20, 1], strides = [1, 1]} : vector<20x2xi32> to vector<20x1xi32>
    %4 = tpu.concatenate %2, %3 in 0 : vector<20x1xi32>, vector<20x1xi32> -> vector<40x1xi32>
    %5 = tpu.iota {dimensions = array<i32: 1>} : vector<40x128xi32>
    %6 = vector.broadcast %4 : vector<40x1xi32> to vector<40x128xi32>
    %7 = arith.cmpi eq, %5, %6 : vector<40x128xi32>
    %8 = arith.extui %7 : vector<40x128xi1> to vector<40x128xi32>
    %9 = arith.sitofp %8 : vector<40x128xi32> to vector<40x128xf32>
    %cst = arith.constant dense<0.000000e+00> : vector<40x100xf32>
    %10 = tpu.matmul %9, %1, %cst {dimension_numbers = #tpu.dot_dimension_numbers<[1], [0], [0], [1], [0, 0, 1, 1], [], []>, precision = #tpu.contract_precision<fp32>} : vector<40x128xf32>, vector<128x100xf32>, vector<40x100xf32> -> vector<40x100xf32>
    %11 = vector.extract_strided_slice %10 {offsets = [0, 0], sizes = [20, 100], strides = [1, 1]} : vector<40x100xf32> to vector<20x100xf32>
    %12 = vector.extract_strided_slice %10 {offsets = [20, 0], sizes = [20, 100], strides = [1, 1]} : vector<40x100xf32> to vector<20x100xf32>
    %13 = tpu.concatenate %11, %12 in 1 : vector<20x100xf32>, vector<20x100xf32> -> vector<20x200xf32>
    %c0_3 = arith.constant 0 : index
    %c0_4 = arith.constant 0 : index
    %14 = vector.load %arg3[%c0_3, %c0_4] : memref<20x200xf32, #tpu.memory_space<vmem>>, vector<20x200xf32>
    tpu.vector_store %arg3[%c0_3, %c0_4], %13 {strides = array<i32>} : memref<20x200xf32, #tpu.memory_space<vmem>>, vector<20x200xf32>,
    return
  }
  func.func @transform_0(%arg0: i32) -> (i32, i32) {
    %c0_i32 = arith.constant 0 : i32
    %c0_i32_0 = arith.constant 0 : i32
    return %arg0, %c0_i32 : i32, i32
  }
  func.func @transform_1(%arg0: i32) -> (i32, i32) {
    %c0_i32 = arith.constant 0 : i32
    %c0_i32_0 = arith.constant 0 : i32
    %c0_i32_1 = arith.constant 0 : i32
    return %c0_i32, %c0_i32_0 : i32, i32
  }
  func.func @transform_2(%arg0: i32) -> (i32, i32) {
    %c0_i32 = arith.constant 0 : i32
    %c0_i32_0 = arith.constant 0 : i32
    return %arg0, %c0_i32 : i32, i32
  }
}

</mosaic_0001>

<llo_original>
// kernel: word_emb.1
$region0: #{word_emb.1}
  #allocation0 [shape = 'u32[]', space=smem, size = 0x4, offset = 0x4, fixed_abs, tag = 'smem constant byte address 0x4 - core index']
  #allocation1 [shape = 'u32[144,128]{1,0:T(1,128)}', space=vmem, size = 0x12000, scoped, tag = 'internal scratch']
  %s0 = inlined_call_operand.vmem [shape: s32[20,2], index: 0, kind: input, shape index: {}]
  %s1 = inlined_call_operand.vmem [shape: f32[128,100], index: 1, kind: input, shape index: {}]
  %s2 = inlined_call_operand.hbm [shape: f32[20,200], index: 2, kind: output, shape index: {}]
  %s3 = sld [smem:[#allocation0]]
  $region18: #{word_emb.1} parent=0
    _
  %s5 = ssub.s32 1, %s3
  %s6 = scalar_select 0, %s5, %s3
  $region1: #{word_emb.1} parent=0
    #allocation2 [shape = 'u8[24576]{0}', space=vmem, size = 0x6000, scoped, tag = 'output window, operand 0, single buffered']
    #allocation3 [shape = 's32[1]{0}', space=sflag, size = 0x4, scoped, tag = 'scoped memory for word_emb.1']
    %7 = vsyncpa [#allocation3], 0
    // Predicated region
    $region2: #{word_emb.1} parent=1 // pred_check
      _
    $region3: #{word_emb.1} parent=1 // pred_check_branch
      %9 = sbr.rel (0) target = $region5
    $region4: #{word_emb.1} parent=1 // pred_region
      _
    $region5: #{word_emb.1} parent=1 // pred_fallthru
      _
    // Predicated region
    $region6: #{word_emb.1} parent=1 // pred_check
      _
    $region7: #{word_emb.1} parent=1 // pred_check_branch
      %11 = sbr.rel (0) target = $region9
    $region8: #{word_emb.1} parent=1 // pred_region
      _
    $region9: #{word_emb.1} parent=1 // pred_fallthru
      _
    %v12 = vld [vmem:[%s0] sm:$0xff]
    %v13 = vld [vmem:[%s0 + $0x8] sm:$0xff]
    %v14 = vld [vmem:[%s0 + $0x10] sm:$0xf]
    %v15 = vld [vmem:[%s1] sm:$0xff]
    %v16 = vld [vmem:[%s1 + $0x8] sm:$0xff]
    %v17 = vld [vmem:[%s1 + $0x10] sm:$0xff]
    %v18 = vld [vmem:[%s1 + $0x18] sm:$0xff]
    %v19 = vld [vmem:[%s1 + $0x20] sm:$0xff]
    %v20 = vld [vmem:[%s1 + $0x28] sm:$0xff]
    %v21 = vld [vmem:[%s1 + $0x30] sm:$0xff]
    %v22 = vld [vmem:[%s1 + $0x38] sm:$0xff]
    %v23 = vld [vmem:[%s1 + $0x40] sm:$0xff]
    %v24 = vld [vmem:[%s1 + $0x48] sm:$0xff]
    %v25 = vld [vmem:[%s1 + $0x50] sm:$0xff]
    %v26 = vld [vmem:[%s1 + $0x58] sm:$0xff]
    %v27 = vld [vmem:[%s1 + $0x60] sm:$0xff]
    %v28 = vld [vmem:[%s1 + $0x68] sm:$0xff]
    %v29 = vld [vmem:[%s1 + $0x70] sm:$0xff]
    %v30 = vld [vmem:[%s1 + $0x78] sm:$0xff]
    %vm31 = vcmask 1043456
    %v32 = vrot.slane %v12, 4
    %v33 = vrot.slane %v13, 4
    %v34 = vsel %vm31, %v32, %v33
    %v35 = vrot.slane %v14, 4
    %v36 = vsel %vm31, %v33, %v35
    %37 = vrot.lane.b32.xlu0 %v32, 127
    %v38 = vpop.permute.xlu0 %37
    %39 = vrot.lane.b32.xlu0 %v34, 127
    %v40 = vpop.permute.xlu0 %39
    %41 = vrot.lane.b32.xlu0 %v36, 127
    %v42 = vpop.permute.xlu0 %41
    %v43 = vsel %vm31, %v14, %v38
    %v44 = vlaneseq
    %v45 = vand.u32 %v44, 127
    %46 = vset.pattern.permute.xlu0 0
    %47 = vperm.xlu0 %46, %v12
    %v48 = vpop.permute.xlu0 %47
    %49 = vset.pattern.permute.xlu0 0
    %50 = vperm.xlu0 %49, %v13
    %v51 = vpop.permute.xlu0 %50
    %52 = vset.pattern.permute.xlu0 0
    %53 = vperm.xlu0 %52, %v43
    %v54 = vpop.permute.xlu0 %53
    %55 = vset.pattern.permute.xlu0 0
    %56 = vperm.xlu0 %55, %v40
    %v57 = vpop.permute.xlu0 %56
    %58 = vset.pattern.permute.xlu0 0
    %59 = vperm.xlu0 %58, %v42
    %v60 = vpop.permute.xlu0 %59
    %vm61 = vcmp.eq.s32.totalorder %v45, %v48
    %vm62 = vcmp.eq.s32.totalorder %v45, %v51
    %vm63 = vcmp.eq.s32.totalorder %v45, %v54
    %vm64 = vcmp.eq.s32.totalorder %v45, %v57
    %vm65 = vcmp.eq.s32.totalorder %v45, %v60
    %v66 = vsel %vm61, 1, 0
    %v67 = vsel %vm62, 1, 0
    %v68 = vsel %vm63, 1, 0
    %v69 = vsel %vm64, 1, 0
    %v70 = vsel %vm65, 1, 0
    %v71 = vcvt.s32.f32 %v66
    %v72 = vcvt.s32.f32 %v67
    %v73 = vcvt.s32.f32 %v68
    %v74 = vcvt.s32.f32 %v69
    %v75 = vcvt.s32.f32 %v70
    %76 = vmatprep.subr.mxu0 0.0
    %v77 = vand.u32 %v15, 4294901760
    %78 = vmatpush1.msra.mxu0 %v77
    %79 = vmatprep.subr.mxu0 0.0
    %v80 = vand.u32 %v16, 4294901760
    %81 = vmatpush1.msra.mxu0 %v80
    %82 = vmatprep.subr.mxu0 0.0
    %v83 = vand.u32 %v17, 4294901760
    %84 = vmatpush1.msra.mxu0 %v83
    %85 = vmatprep.subr.mxu0 0.0
    %v86 = vand.u32 %v18, 4294901760
    %87 = vmatpush1.msra.mxu0 %v86
    %88 = vmatprep.subr.mxu0 0.0
    %v89 = vand.u32 %v19, 4294901760
    %90 = vmatpush1.msra.mxu0 %v89
    %91 = vmatprep.subr.mxu0 0.0
    %v92 = vand.u32 %v20, 4294901760
    %93 = vmatpush1.msra.mxu0 %v92
    %94 = vmatprep.subr.mxu0 0.0
    %v95 = vand.u32 %v21, 4294901760
    %96 = vmatpush1.msra.mxu0 %v95
    %97 = vmatprep.subr.mxu0 0.0
    %v98 = vand.u32 %v22, 4294901760
    %99 = vmatpush1.msra.mxu0 %v98
    %100 = vmatprep.subr.mxu0 0.0
    %v101 = vand.u32 %v23, 4294901760
    %102 = vmatpush1.msra.mxu0 %v101
    %103 = vmatprep.subr.mxu0 0.0
    %v104 = vand.u32 %v24, 4294901760
    %105 = vmatpush1.msra.mxu0 %v104
    %106 = vmatprep.subr.mxu0 0.0
    %v107 = vand.u32 %v25, 4294901760
    %108 = vmatpush1.msra.mxu0 %v107
    %109 = vmatprep.subr.mxu0 0.0
    %v110 = vand.u32 %v26, 4294901760
    %111 = vmatpush1.msra.mxu0 %v110
    %112 = vmatprep.subr.mxu0 0.0
    %v113 = vand.u32 %v27, 4294901760
    %114 = vmatpush1.msra.mxu0 %v113
    %115 = vmatprep.subr.mxu0 0.0
    %v116 = vand.u32 %v28, 4294901760
    %117 = vmatpush1.msra.mxu0 %v116
    %118 = vmatprep.subr.mxu0 0.0
    %v119 = vand.u32 %v29, 4294901760
    %120 = vmatpush1.msra.mxu0 %v119
    %121 = vmatprep.subr.mxu0 0.0
    %v122 = vand.u32 %v30, 4294901760
    %123 = vmatpush1.msra.mxu0 %v122
    %124 = vmatprep.subr.mxu0 0.0
    %125 = vmatpush1.msra.mxu0 0.0
    %126 = vmatprep.subr.mxu0 0.0
    %127 = vmatpush1.msra.mxu0 0.0
    %128 = vmatprep.subr.mxu0 0.0
    %129 = vmatpush1.msra.mxu0 0.0
    %130 = vmatprep.subr.mxu0 0.0
    %131 = vmatpush1.msra.mxu0 0.0
    %132 = vmatprep.subr.mxu0 0.0
    %133 = vmatpush1.msra.mxu0 0.0
    %134 = vmatprep.subr.mxu0 0.0
    %135 = vmatpush1.msra.mxu0 0.0
    %136 = vmatprep.subr.mxu0 0.0
    %137 = vmatpush1.msra.mxu0 0.0
    %138 = vmatprep.subr.mxu0 0.0
    %139 = vmatpush1.msra.mxu0 0.0
    %140 = vmatprep.subr.mxu0 0.0
    %141 = vmatpush1.msra.mxu0 0.0
    %142 = vmatprep.subr.mxu0 0.0
    %143 = vmatpush1.msra.mxu0 0.0
    %144 = vmatprep.subr.mxu0 0.0
    %145 = vmatpush1.msra.mxu0 0.0
    %146 = vmatprep.subr.mxu0 0.0
    %147 = vmatpush1.msra.mxu0 0.0
    %148 = vmatprep.subr.mxu0 0.0
    %149 = vmatpush1.msra.mxu0 0.0
    %150 = vmatprep.subr.mxu0 0.0
    %151 = vmatpush1.msra.mxu0 0.0
    %152 = vmatprep.subr.mxu0 0.0
    %153 = vmatpush1.msra.mxu0 0.0
    %154 = vmatprep.subr.mxu0 0.0
    %155 = vmatpush1.msra.mxu0 0.0
    %156 = vmatprep.mubr.f32.mxu0 0.0
    %v157 = vand.u32 %v71, 4294901760
    %v158 = vsub.f32 %v71, %v157
    %v159 = vand.u32 %v158, 4294901760
    %v160 = vsub.f32 %v158, %v159
    %v161 = vand.u32 %v160, 4294901760
    %162 = vmatmul.mubr.f32.gmra.mrb[0].mxu0 %v161
    %v163 = vpop.f32.mrb[0].mxu0
    %v164 = vadd.f32 0.0, %v163
    %v165 = vpop.f32.mrb[0].mxu0
    %166 = vmatprep.mubr.f32.mxu0 0.0
    %v167 = vand.u32 %v72, 4294901760
    %v168 = vsub.f32 %v72, %v167
    %v169 = vand.u32 %v168, 4294901760
    %v170 = vsub.f32 %v168, %v169
    %v171 = vand.u32 %v170, 4294901760
    %172 = vmatmul.mubr.f32.gmra.mrb[0].mxu0 %v171
    %v173 = vpop.f32.mrb[0].mxu0
    %v174 = vadd.f32 0.0, %v173
    %v175 = vpop.f32.mrb[0].mxu0
    %176 = vmatprep.mubr.f32.mxu0 0.0
    %v177 = vand.u32 %v73, 4294901760
    %v178 = vsub.f32 %v73, %v177
    %v179 = vand.u32 %v178, 4294901760
    %v180 = vsub.f32 %v178, %v179
    %v181 = vand.u32 %v180, 4294901760
    %182 = vmatmul.mubr.f32.gmra.mrb[0].mxu0 %v181
    %v183 = vpop.f32.mrb[0].mxu0
    %v184 = vadd.f32 0.0, %v183
    %v185 = vpop.f32.mrb[0].mxu0
    %186 = vmatprep.mubr.f32.mxu0 0.0
    %v187 = vand.u32 %v74, 4294901760
    %v188 = vsub.f32 %v74, %v187
    %v189 = vand.u32 %v188, 4294901760
    %v190 = vsub.f32 %v188, %v189
    %v191 = vand.u32 %v190, 4294901760
    %192 = vmatmul.mubr.f32.gmra.mrb[0].mxu0 %v191
    %v193 = vpop.f32.mrb[0].mxu0
    %v194 = vadd.f32 0.0, %v193
    %v195 = vpop.f32.mrb[0].mxu0
    %196 = vmatprep.mubr.f32.mxu0 0.0
    %v197 = vand.u32 %v75, 4294901760
    %v198 = vsub.f32 %v75, %v197
    %v199 = vand.u32 %v198, 4294901760
    %v200 = vsub.f32 %v198, %v199
    %v201 = vand.u32 %v200, 4294901760
    %202 = vmatmul.mubr.f32.gmra.mrb[0].mxu0 %v201
    %v203 = vpop.f32.mrb[0].mxu0
    %v204 = vadd.f32 0.0, %v203
    %v205 = vpop.f32.mrb[0].mxu0
    %206 = vdwg.mxu0
    %207 = vmatprep.subr.mxu0 0.0
    %v208 = vand.u32 %v15, 4294901760
    %v209 = vsub.f32 %v15, %v208
    %v210 = vand.u32 %v209, 4294901760
    %v211 = vsub.f32 %v209, %v210
    %v212 = vand.u32 %v211, 4294901760
    %213 = vmatpush1.msra.mxu0 %v212
    %214 = vmatprep.subr.mxu0 0.0
    %v215 = vand.u32 %v16, 4294901760
    %v216 = vsub.f32 %v16, %v215
    %v217 = vand.u32 %v216, 4294901760
    %v218 = vsub.f32 %v216, %v217
    %v219 = vand.u32 %v218, 4294901760
    %220 = vmatpush1.msra.mxu0 %v219
    %221 = vmatprep.subr.mxu0 0.0
    %v222 = vand.u32 %v17, 4294901760
    %v223 = vsub.f32 %v17, %v222
    %v224 = vand.u32 %v223, 4294901760
    %v225 = vsub.f32 %v223, %v224
    %v226 = vand.u32 %v225, 4294901760
    %227 = vmatpush1.msra.mxu0 %v226
    %228 = vmatprep.subr.mxu0 0.0
    %v229 = vand.u32 %v18, 4294901760
    %v230 = vsub.f32 %v18, %v229
    %v231 = vand.u32 %v230, 4294901760
    %v232 = vsub.f32 %v230, %v231
    %v233 = vand.u32 %v232, 4294901760
    %234 = vmatpush1.msra.mxu0 %v233
    %235 = vmatprep.subr.mxu0 0.0
    %v236 = vand.u32 %v19, 4294901760
    %v237 = vsub.f32 %v19, %v236
    %v238 = vand.u32 %v237, 4294901760
    %v239 = vsub.f32 %v237, %v238
    %v240 = vand.u32 %v239, 4294901760
    %241 = vmatpush1.msra.mxu0 %v240
    %242 = vmatprep.subr.mxu0 0.0
    %v243 = vand.u32 %v20, 4294901760
    %v244 = vsub.f32 %v20, %v243
    %v245 = vand.u32 %v244, 4294901760
    %v246 = vsub.f32 %v244, %v245
    %v247 = vand.u32 %v246, 4294901760
    %248 = vmatpush1.msra.mxu0 %v247
    %249 = vmatprep.subr.mxu0 0.0
    %v250 = vand.u32 %v21, 4294901760
    %v251 = vsub.f32 %v21, %v250
    %v252 = vand.u32 %v251, 4294901760
    %v253 = vsub.f32 %v251, %v252
    %v254 = vand.u32 %v253, 4294901760
    %255 = vmatpush1.msra.mxu0 %v254
    %256 = vmatprep.subr.mxu0 0.0
    %v257 = vand.u32 %v22, 4294901760
    %v258 = vsub.f32 %v22, %v257
    %v259 = vand.u32 %v258, 4294901760
    %v260 = vsub.f32 %v258, %v259
    %v261 = vand.u32 %v260, 4294901760
    %262 = vmatpush1.msra.mxu0 %v261
    %263 = vmatprep.subr.mxu0 0.0
    %v264 = vand.u32 %v23, 4294901760
    %v265 = vsub.f32 %v23, %v264
    %v266 = vand.u32 %v265, 4294901760
    %v267 = vsub.f32 %v265, %v266
    %v268 = vand.u32 %v267, 4294901760
    %269 = vmatpush1.msra.mxu0 %v268
    %270 = vmatprep.subr.mxu0 0.0
    %v271 = vand.u32 %v24, 4294901760
    %v272 = vsub.f32 %v24, %v271
    %v273 = vand.u32 %v272, 4294901760
    %v274 = vsub.f32 %v272, %v273
    %v275 = vand.u32 %v274, 4294901760
    %276 = vmatpush1.msra.mxu0 %v275
    %277 = vmatprep.subr.mxu0 0.0
    %v278 = vand.u32 %v25, 4294901760
    %v279 = vsub.f32 %v25, %v278
    %v280 = vand.u32 %v279, 4294901760
    %v281 = vsub.f32 %v279, %v280
    %v282 = vand.u32 %v281, 4294901760
    %283 = vmatpush1.msra.mxu0 %v282
    %284 = vmatprep.subr.mxu0 0.0
    %v285 = vand.u32 %v26, 4294901760
    %v286 = vsub.f32 %v26, %v285
    %v287 = vand.u32 %v286, 4294901760
    %v288 = vsub.f32 %v286, %v287
    %v289 = vand.u32 %v288, 4294901760
    %290 = vmatpush1.msra.mxu0 %v289
    %291 = vmatprep.subr.mxu0 0.0
    %v292 = vand.u32 %v27, 4294901760
    %v293 = vsub.f32 %v27, %v292
    %v294 = vand.u32 %v293, 4294901760
    %v295 = vsub.f32 %v293, %v294
    %v296 = vand.u32 %v295, 4294901760
    %297 = vmatpush1.msra.mxu0 %v296
    %298 = vmatprep.subr.mxu0 0.0
    %v299 = vand.u32 %v28, 4294901760
    %v300 = vsub.f32 %v28, %v299
    %v301 = vand.u32 %v300, 4294901760
    %v302 = vsub.f32 %v300, %v301
    %v303 = vand.u32 %v302, 4294901760
    %304 = vmatpush1.msra.mxu0 %v303
    %305 = vmatprep.subr.mxu0 0.0
    %v306 = vand.u32 %v29, 4294901760
    %v307 = vsub.f32 %v29, %v306
    %v308 = vand.u32 %v307, 4294901760
    %v309 = vsub.f32 %v307, %v308
    %v310 = vand.u32 %v309, 4294901760
    %311 = vmatpush1.msra.mxu0 %v310
    %312 = vmatprep.subr.mxu0 0.0
    %v313 = vand.u32 %v30, 4294901760
    %v314 = vsub.f32 %v30, %v313
    %v315 = vand.u32 %v314, 4294901760
    %v316 = vsub.f32 %v314, %v315
    %v317 = vand.u32 %v316, 4294901760
    %318 = vmatpush1.msra.mxu0 %v317
    %319 = vmatprep.subr.mxu0 0.0
    %320 = vmatpush1.msra.mxu0 0.0
    %321 = vmatprep.subr.mxu0 0.0
    %322 = vmatpush1.msra.mxu0 0.0
    %323 = vmatprep.subr.mxu0 0.0
    %324 = vmatpush1.msra.mxu0 0.0
    %325 = vmatprep.subr.mxu0 0.0
    %326 = vmatpush1.msra.mxu0 0.0
    %327 = vmatprep.subr.mxu0 0.0
    %328 = vmatpush1.msra.mxu0 0.0
    %329 = vmatprep.subr.mxu0 0.0
    %330 = vmatpush1.msra.mxu0 0.0
    %331 = vmatprep.subr.mxu0 0.0
    %332 = vmatpush1.msra.mxu0 0.0
    %333 = vmatprep.subr.mxu0 0.0
    %334 = vmatpush1.msra.mxu0 0.0
    %335 = vmatprep.subr.mxu0 0.0
    %336 = vmatpush1.msra.mxu0 0.0
    %337 = vmatprep.subr.mxu0 0.0
    %338 = vmatpush1.msra.mxu0 0.0
    %339 = vmatprep.subr.mxu0 0.0
    %340 = vmatpush1.msra.mxu0 0.0
    %341 = vmatprep.subr.mxu0 0.0
    %342 = vmatpush1.msra.mxu0 0.0
    %343 = vmatprep.subr.mxu0 0.0
    %344 = vmatpush1.msra.mxu0 0.0
    %345 = vmatprep.subr.mxu0 0.0
    %346 = vmatpush1.msra.mxu0 0.0
    %347 = vmatprep.subr.mxu0 0.0
    %348 = vmatpush1.msra.mxu0 0.0
    %349 = vmatprep.subr.mxu0 0.0
    %350 = vmatpush1.msra.mxu0 0.0
    %351 = vmatprep.mubr.f32.mxu0 0.0
    %v352 = vand.u32 %v71, 4294901760
    %353 = vmatmul.mubr.f32.gmra.mrb[0].mxu0 %v352
    %v354 = vpop.f32.mrb[0].mxu0
    %v355 = vadd.f32 %v164, %v354
    %v356 = vpop.f32.mrb[0].mxu0
    %357 = vmatprep.mubr.f32.mxu0 0.0
    %v358 = vand.u32 %v72, 4294901760
    %359 = vmatmul.mubr.f32.gmra.mrb[0].mxu0 %v358
    %v360 = vpop.f32.mrb[0].mxu0
    %v361 = vadd.f32 %v174, %v360
    %v362 = vpop.f32.mrb[0].mxu0
    %363 = vmatprep.mubr.f32.mxu0 0.0
    %v364 = vand.u32 %v73, 4294901760
    %365 = vmatmul.mubr.f32.gmra.mrb[0].mxu0 %v364
    %v366 = vpop.f32.mrb[0].mxu0
    %v367 = vadd.f32 %v184, %v366
    %v368 = vpop.f32.mrb[0].mxu0
    %369 = vmatprep.mubr.f32.mxu0 0.0
    %v370 = vand.u32 %v74, 4294901760
    %371 = vmatmul.mubr.f32.gmra.mrb[0].mxu0 %v370
    %v372 = vpop.f32.mrb[0].mxu0
    %v373 = vadd.f32 %v194, %v372
    %v374 = vpop.f32.mrb[0].mxu0
    %375 = vmatprep.mubr.f32.mxu0 0.0
    %v376 = vand.u32 %v75, 4294901760
    %377 = vmatmul.mubr.f32.gmra.mrb[0].mxu0 %v376
    %v378 = vpop.f32.mrb[0].mxu0
    %v379 = vadd.f32 %v204, %v378
    %v380 = vpop.f32.mrb[0].mxu0
    %381 = vdwg.mxu0
    %382 = vmatprep.subr.mxu0 0.0
    %v383 = vand.u32 %v15, 4294901760
    %v384 = vsub.f32 %v15, %v383
    %385 = vmatpush1.msra.mxu0 %v384
    %386 = vmatprep.subr.mxu0 0.0
    %v387 = vand.u32 %v16, 4294901760
    %v388 = vsub.f32 %v16, %v387
    %389 = vmatpush1.msra.mxu0 %v388
    %390 = vmatprep.subr.mxu0 0.0
    %v391 = vand.u32 %v17, 4294901760
    %v392 = vsub.f32 %v17, %v391
    %393 = vmatpush1.msra.mxu0 %v392
    %394 = vmatprep.subr.mxu0 0.0
    %v395 = vand.u32 %v18, 4294901760
    %v396 = vsub.f32 %v18, %v395
    %397 = vmatpush1.msra.mxu0 %v396
    %398 = vmatprep.subr.mxu0 0.0
    %v399 = vand.u32 %v19, 4294901760
    %v400 = vsub.f32 %v19, %v399
    %401 = vmatpush1.msra.mxu0 %v400
    %402 = vmatprep.subr.mxu0 0.0
    %v403 = vand.u32 %v20, 4294901760
    %v404 = vsub.f32 %v20, %v403
    %405 = vmatpush1.msra.mxu0 %v404
    %406 = vmatprep.subr.mxu0 0.0
    %v407 = vand.u32 %v21, 4294901760
    %v408 = vsub.f32 %v21, %v407
    %409 = vmatpush1.msra.mxu0 %v408
    %410 = vmatprep.subr.mxu0 0.0
    %v411 = vand.u32 %v22, 4294901760
    %v412 = vsub.f32 %v22, %v411
    %413 = vmatpush1.msra.mxu0 %v412
    %414 = vmatprep.subr.mxu0 0.0
    %v415 = vand.u32 %v23, 4294901760
    %v416 = vsub.f32 %v23, %v415
    %417 = vmatpush1.msra.mxu0 %v416
    %418 = vmatprep.subr.mxu0 0.0
    %v419 = vand.u32 %v24, 4294901760
    %v420 = vsub.f32 %v24, %v419
    %421 = vmatpush1.msra.mxu0 %v420
    %422 = vmatprep.subr.mxu0 0.0
    %v423 = vand.u32 %v25, 4294901760
    %v424 = vsub.f32 %v25, %v423
    %425 = vmatpush1.msra.mxu0 %v424
    %426 = vmatprep.subr.mxu0 0.0
    %v427 = vand.u32 %v26, 4294901760
    %v428 = vsub.f32 %v26, %v427
    %429 = vmatpush1.msra.mxu0 %v428
    %430 = vmatprep.subr.mxu0 0.0
    %v431 = vand.u32 %v27, 4294901760
    %v432 = vsub.f32 %v27, %v431
    %433 = vmatpush1.msra.mxu0 %v432
    %434 = vmatprep.subr.mxu0 0.0
    %v435 = vand.u32 %v28, 4294901760
    %v436 = vsub.f32 %v28, %v435
    %437 = vmatpush1.msra.mxu0 %v436
    %438 = vmatprep.subr.mxu0 0.0
    %v439 = vand.u32 %v29, 4294901760
    %v440 = vsub.f32 %v29, %v439
    %441 = vmatpush1.msra.mxu0 %v440
    %442 = vmatprep.subr.mxu0 0.0
    %v443 = vand.u32 %v30, 4294901760
    %v444 = vsub.f32 %v30, %v443
    %445 = vmatpush1.msra.mxu0 %v444
    %446 = vmatprep.subr.mxu0 0.0
    %447 = vmatpush1.msra.mxu0 0.0
    %448 = vmatprep.subr.mxu0 0.0
    %449 = vmatpush1.msra.mxu0 0.0
    %450 = vmatprep.subr.mxu0 0.0
    %451 = vmatpush1.msra.mxu0 0.0
    %452 = vmatprep.subr.mxu0 0.0
    %453 = vmatpush1.msra.mxu0 0.0
    %454 = vmatprep.subr.mxu0 0.0
    %455 = vmatpush1.msra.mxu0 0.0
    %456 = vmatprep.subr.mxu0 0.0
    %457 = vmatpush1.msra.mxu0 0.0
    %458 = vmatprep.subr.mxu0 0.0
    %459 = vmatpush1.msra.mxu0 0.0
    %460 = vmatprep.subr.mxu0 0.0
    %461 = vmatpush1.msra.mxu0 0.0
    %462 = vmatprep.subr.mxu0 0.0
    %463 = vmatpush1.msra.mxu0 0.0
    %464 = vmatprep.subr.mxu0 0.0
    %465 = vmatpush1.msra.mxu0 0.0
    %466 = vmatprep.subr.mxu0 0.0
    %467 = vmatpush1.msra.mxu0 0.0
    %468 = vmatprep.subr.mxu0 0.0
    %469 = vmatpush1.msra.mxu0 0.0
    %470 = vmatprep.subr.mxu0 0.0
    %471 = vmatpush1.msra.mxu0 0.0
    %472 = vmatprep.subr.mxu0 0.0
    %473 = vmatpush1.msra.mxu0 0.0
    %474 = vmatprep.subr.mxu0 0.0
    %475 = vmatpush1.msra.mxu0 0.0
    %476 = vmatprep.subr.mxu0 0.0
    %477 = vmatpush1.msra.mxu0 0.0
    %478 = vmatprep.mubr.f32.mxu0 0.0
    %v479 = vand.u32 %v71, 4294901760
    %v480 = vsub.f32 %v71, %v479
    %481 = vmatmul.mubr.f32.gmra.mrb[0].mxu0 %v480
    %v482 = vpop.f32.mrb[0].mxu0
    %v483 = vadd.f32 %v355, %v482
    %v484 = vpop.f32.mrb[0].mxu0
    %485 = vmatprep.mubr.f32.mxu0 0.0
    %v486 = vand.u32 %v72, 4294901760
    %v487 = vsub.f32 %v72, %v486
    %488 = vmatmul.mubr.f32.gmra.mrb[0].mxu0 %v487
    %v489 = vpop.f32.mrb[0].mxu0
    %v490 = vadd.f32 %v361, %v489
    %v491 = vpop.f32.mrb[0].mxu0
    %492 = vmatprep.mubr.f32.mxu0 0.0
    %v493 = vand.u32 %v73, 4294901760
    %v494 = vsub.f32 %v73, %v493
    %495 = vmatmul.mubr.f32.gmra.mrb[0].mxu0 %v494
    %v496 = vpop.f32.mrb[0].mxu0
    %v497 = vadd.f32 %v367, %v496
    %v498 = vpop.f32.mrb[0].mxu0
    %499 = vmatprep.mubr.f32.mxu0 0.0
    %v500 = vand.u32 %v74, 4294901760
    %v501 = vsub.f32 %v74, %v500
    %502 = vmatmul.mubr.f32.gmra.mrb[0].mxu0 %v501
    %v503 = vpop.f32.mrb[0].mxu0
    %v504 = vadd.f32 %v373, %v503
    %v505 = vpop.f32.mrb[0].mxu0
    %506 = vmatprep.mubr.f32.mxu0 0.0
    %v507 = vand.u32 %v75, 4294901760
    %v508 = vsub.f32 %v75, %v507
    %509 = vmatmul.mubr.f32.gmra.mrb[0].mxu0 %v508
    %v510 = vpop.f32.mrb[0].mxu0
    %v511 = vadd.f32 %v379, %v510
    %v512 = vpop.f32.mrb[0].mxu0
    %513 = vdwg.mxu0
    %514 = vmatprep.subr.mxu0 0.0
    %v515 = vand.u32 %v15, 4294901760
    %516 = vmatpush1.msra.mxu0 %v515
    %517 = vmatprep.subr.mxu0 0.0
    %v518 = vand.u32 %v16, 4294901760
    %519 = vmatpush1.msra.mxu0 %v518
    %520 = vmatprep.subr.mxu0 0.0
    %v521 = vand.u32 %v17, 4294901760
    %522 = vmatpush1.msra.mxu0 %v521
    %523 = vmatprep.subr.mxu0 0.0
    %v524 = vand.u32 %v18, 4294901760
    %525 = vmatpush1.msra.mxu0 %v524
    %526 = vmatprep.subr.mxu0 0.0
    %v527 = vand.u32 %v19, 4294901760
    %528 = vmatpush1.msra.mxu0 %v527
    %529 = vmatprep.subr.mxu0 0.0
    %v530 = vand.u32 %v20, 4294901760
    %531 = vmatpush1.msra.mxu0 %v530
    %532 = vmatprep.subr.mxu0 0.0
    %v533 = vand.u32 %v21, 4294901760
    %534 = vmatpush1.msra.mxu0 %v533
    %535 = vmatprep.subr.mxu0 0.0
    %v536 = vand.u32 %v22, 4294901760
    %537 = vmatpush1.msra.mxu0 %v536
    %538 = vmatprep.subr.mxu0 0.0
    %v539 = vand.u32 %v23, 4294901760
    %540 = vmatpush1.msra.mxu0 %v539
    %541 = vmatprep.subr.mxu0 0.0
    %v542 = vand.u32 %v24, 4294901760
    %543 = vmatpush1.msra.mxu0 %v542
    %544 = vmatprep.subr.mxu0 0.0
    %v545 = vand.u32 %v25, 4294901760
    %546 = vmatpush1.msra.mxu0 %v545
    %547 = vmatprep.subr.mxu0 0.0
    %v548 = vand.u32 %v26, 4294901760
    %549 = vmatpush1.msra.mxu0 %v548
    %550 = vmatprep.subr.mxu0 0.0
    %v551 = vand.u32 %v27, 4294901760
    %552 = vmatpush1.msra.mxu0 %v551
    %553 = vmatprep.subr.mxu0 0.0
    %v554 = vand.u32 %v28, 4294901760
    %555 = vmatpush1.msra.mxu0 %v554
    %556 = vmatprep.subr.mxu0 0.0
    %v557 = vand.u32 %v29, 4294901760
    %558 = vmatpush1.msra.mxu0 %v557
    %559 = vmatprep.subr.mxu0 0.0
    %v560 = vand.u32 %v30, 4294901760
    %561 = vmatpush1.msra.mxu0 %v560
    %562 = vmatprep.subr.mxu0 0.0
    %563 = vmatpush1.msra.mxu0 0.0
    %564 = vmatprep.subr.mxu0 0.0
    %565 = vmatpush1.msra.mxu0 0.0
    %566 = vmatprep.subr.mxu0 0.0
    %567 = vmatpush1.msra.mxu0 0.0
    %568 = vmatprep.subr.mxu0 0.0
    %569 = vmatpush1.msra.mxu0 0.0
    %570 = vmatprep.subr.mxu0 0.0
    %571 = vmatpush1.msra.mxu0 0.0
    %572 = vmatprep.subr.mxu0 0.0
    %573 = vmatpush1.msra.mxu0 0.0
    %574 = vmatprep.subr.mxu0 0.0
    %575 = vmatpush1.msra.mxu0 0.0
    %576 = vmatprep.subr.mxu0 0.0
    %577 = vmatpush1.msra.mxu0 0.0
    %578 = vmatprep.subr.mxu0 0.0
    %579 = vmatpush1.msra.mxu0 0.0
    %580 = vmatprep.subr.mxu0 0.0
    %581 = vmatpush1.msra.mxu0 0.0
    %582 = vmatprep.subr.mxu0 0.0
    %583 = vmatpush1.msra.mxu0 0.0
    %584 = vmatprep.subr.mxu0 0.0
    %585 = vmatpush1.msra.mxu0 0.0
    %586 = vmatprep.subr.mxu0 0.0
    %587 = vmatpush1.msra.mxu0 0.0
    %588 = vmatprep.subr.mxu0 0.0
    %589 = vmatpush1.msra.mxu0 0.0
    %590 = vmatprep.subr.mxu0 0.0
    %591 = vmatpush1.msra.mxu0 0.0
    %592 = vmatprep.subr.mxu0 0.0
    %593 = vmatpush1.msra.mxu0 0.0
    %594 = vmatprep.mubr.f32.mxu0 0.0
    %v595 = vand.u32 %v71, 4294901760
    %v596 = vsub.f32 %v71, %v595
    %v597 = vand.u32 %v596, 4294901760
    %598 = vmatmul.mubr.f32.gmra.mrb[0].mxu0 %v597
    %v599 = vpop.f32.mrb[0].mxu0
    %v600 = vadd.f32 %v483, %v599
    %v601 = vpop.f32.mrb[0].mxu0
    %602 = vmatprep.mubr.f32.mxu0 0.0
    %v603 = vand.u32 %v72, 4294901760
    %v604 = vsub.f32 %v72, %v603
    %v605 = vand.u32 %v604, 4294901760
    %606 = vmatmul.mubr.f32.gmra.mrb[0].mxu0 %v605
    %v607 = vpop.f32.mrb[0].mxu0
    %v608 = vadd.f32 %v490, %v607
    %v609 = vpop.f32.mrb[0].mxu0
    %610 = vmatprep.mubr.f32.mxu0 0.0
    %v611 = vand.u32 %v73, 4294901760
    %v612 = vsub.f32 %v73, %v611
    %v613 = vand.u32 %v612, 4294901760
    %614 = vmatmul.mubr.f32.gmra.mrb[0].mxu0 %v613
    %v615 = vpop.f32.mrb[0].mxu0
    %v616 = vadd.f32 %v497, %v615
    %v617 = vpop.f32.mrb[0].mxu0
    %618 = vmatprep.mubr.f32.mxu0 0.0
    %v619 = vand.u32 %v74, 4294901760
    %v620 = vsub.f32 %v74, %v619
    %v621 = vand.u32 %v620, 4294901760
    %622 = vmatmul.mubr.f32.gmra.mrb[0].mxu0 %v621
    %v623 = vpop.f32.mrb[0].mxu0
    %v624 = vadd.f32 %v504, %v623
    %v625 = vpop.f32.mrb[0].mxu0
    %626 = vmatprep.mubr.f32.mxu0 0.0
    %v627 = vand.u32 %v75, 4294901760
    %v628 = vsub.f32 %v75, %v627
    %v629 = vand.u32 %v628, 4294901760
    %630 = vmatmul.mubr.f32.gmra.mrb[0].mxu0 %v629
    %v631 = vpop.f32.mrb[0].mxu0
    %v632 = vadd.f32 %v511, %v631
    %v633 = vpop.f32.mrb[0].mxu0
    %634 = vdwg.mxu0
    %635 = vmatprep.subr.mxu0 0.0
    %v636 = vand.u32 %v15, 4294901760
    %v637 = vsub.f32 %v15, %v636
    %v638 = vand.u32 %v637, 4294901760
    %639 = vmatpush1.msra.mxu0 %v638
    %640 = vmatprep.subr.mxu0 0.0
    %v641 = vand.u32 %v16, 4294901760
    %v642 = vsub.f32 %v16, %v641
    %v643 = vand.u32 %v642, 4294901760
    %644 = vmatpush1.msra.mxu0 %v643
    %645 = vmatprep.subr.mxu0 0.0
    %v646 = vand.u32 %v17, 4294901760
    %v647 = vsub.f32 %v17, %v646
    %v648 = vand.u32 %v647, 4294901760
    %649 = vmatpush1.msra.mxu0 %v648
    %650 = vmatprep.subr.mxu0 0.0
    %v651 = vand.u32 %v18, 4294901760
    %v652 = vsub.f32 %v18, %v651
    %v653 = vand.u32 %v652, 4294901760
    %654 = vmatpush1.msra.mxu0 %v653
    %655 = vmatprep.subr.mxu0 0.0
    %v656 = vand.u32 %v19, 4294901760
    %v657 = vsub.f32 %v19, %v656
    %v658 = vand.u32 %v657, 4294901760
    %659 = vmatpush1.msra.mxu0 %v658
    %660 = vmatprep.subr.mxu0 0.0
    %v661 = vand.u32 %v20, 4294901760
    %v662 = vsub.f32 %v20, %v661
    %v663 = vand.u32 %v662, 4294901760
    %664 = vmatpush1.msra.mxu0 %v663
    %665 = vmatprep.subr.mxu0 0.0
    %v666 = vand.u32 %v21, 4294901760
    %v667 = vsub.f32 %v21, %v666
    %v668 = vand.u32 %v667, 4294901760
    %669 = vmatpush1.msra.mxu0 %v668
    %670 = vmatprep.subr.mxu0 0.0
    %v671 = vand.u32 %v22, 4294901760
    %v672 = vsub.f32 %v22, %v671
    %v673 = vand.u32 %v672, 4294901760
    %674 = vmatpush1.msra.mxu0 %v673
    %675 = vmatprep.subr.mxu0 0.0
    %v676 = vand.u32 %v23, 4294901760
    %v677 = vsub.f32 %v23, %v676
    %v678 = vand.u32 %v677, 4294901760
    %679 = vmatpush1.msra.mxu0 %v678
    %680 = vmatprep.subr.mxu0 0.0
    %v681 = vand.u32 %v24, 4294901760
    %v682 = vsub.f32 %v24, %v681
    %v683 = vand.u32 %v682, 4294901760
    %684 = vmatpush1.msra.mxu0 %v683
    %685 = vmatprep.subr.mxu0 0.0
    %v686 = vand.u32 %v25, 4294901760
    %v687 = vsub.f32 %v25, %v686
    %v688 = vand.u32 %v687, 4294901760
    %689 = vmatpush1.msra.mxu0 %v688
    %690 = vmatprep.subr.mxu0 0.0
    %v691 = vand.u32 %v26, 4294901760
    %v692 = vsub.f32 %v26, %v691
    %v693 = vand.u32 %v692, 4294901760
    %694 = vmatpush1.msra.mxu0 %v693
    %695 = vmatprep.subr.mxu0 0.0
    %v696 = vand.u32 %v27, 4294901760
    %v697 = vsub.f32 %v27, %v696
    %v698 = vand.u32 %v697, 4294901760
    %699 = vmatpush1.msra.mxu0 %v698
    %700 = vmatprep.subr.mxu0 0.0
    %v701 = vand.u32 %v28, 4294901760
    %v702 = vsub.f32 %v28, %v701
    %v703 = vand.u32 %v702, 4294901760
    %704 = vmatpush1.msra.mxu0 %v703
    %705 = vmatprep.subr.mxu0 0.0
    %v706 = vand.u32 %v29, 4294901760
    %v707 = vsub.f32 %v29, %v706
    %v708 = vand.u32 %v707, 4294901760
    %709 = vmatpush1.msra.mxu0 %v708
    %710 = vmatprep.subr.mxu0 0.0
    %v711 = vand.u32 %v30, 4294901760
    %v712 = vsub.f32 %v30, %v711
    %v713 = vand.u32 %v712, 4294901760
    %714 = vmatpush1.msra.mxu0 %v713
    %715 = vmatprep.subr.mxu0 0.0
    %716 = vmatpush1.msra.mxu0 0.0
    %717 = vmatprep.subr.mxu0 0.0
    %718 = vmatpush1.msra.mxu0 0.0
    %719 = vmatprep.subr.mxu0 0.0
    %720 = vmatpush1.msra.mxu0 0.0
    %721 = vmatprep.subr.mxu0 0.0
    %722 = vmatpush1.msra.mxu0 0.0
    %723 = vmatprep.subr.mxu0 0.0
    %724 = vmatpush1.msra.mxu0 0.0
    %725 = vmatprep.subr.mxu0 0.0
    %726 = vmatpush1.msra.mxu0 0.0
    %727 = vmatprep.subr.mxu0 0.0
    %728 = vmatpush1.msra.mxu0 0.0
    %729 = vmatprep.subr.mxu0 0.0
    %730 = vmatpush1.msra.mxu0 0.0
    %731 = vmatprep.subr.mxu0 0.0
    %732 = vmatpush1.msra.mxu0 0.0
    %733 = vmatprep.subr.mxu0 0.0
    %734 = vmatpush1.msra.mxu0 0.0
    %735 = vmatprep.subr.mxu0 0.0
    %736 = vmatpush1.msra.mxu0 0.0
    %737 = vmatprep.subr.mxu0 0.0
    %738 = vmatpush1.msra.mxu0 0.0
    %739 = vmatprep.subr.mxu0 0.0
    %740 = vmatpush1.msra.mxu0 0.0
    %741 = vmatprep.subr.mxu0 0.0
    %742 = vmatpush1.msra.mxu0 0.0
    %743 = vmatprep.subr.mxu0 0.0
    %744 = vmatpush1.msra.mxu0 0.0
    %745 = vmatprep.subr.mxu0 0.0
    %746 = vmatpush1.msra.mxu0 0.0
    %747 = vmatprep.mubr.f32.mxu0 0.0
    %v748 = vand.u32 %v71, 4294901760
    %749 = vmatmul.mubr.f32.gmra.mrb[0].mxu0 %v748
    %v750 = vpop.f32.mrb[0].mxu0
    %v751 = vadd.f32 %v600, %v750
    %v752 = vpop.f32.mrb[0].mxu0
    %753 = vmatprep.mubr.f32.mxu0 0.0
    %v754 = vand.u32 %v72, 4294901760
    %755 = vmatmul.mubr.f32.gmra.mrb[0].mxu0 %v754
    %v756 = vpop.f32.mrb[0].mxu0
    %v757 = vadd.f32 %v608, %v756
    %v758 = vpop.f32.mrb[0].mxu0
    %759 = vmatprep.mubr.f32.mxu0 0.0
    %v760 = vand.u32 %v73, 4294901760
    %761 = vmatmul.mubr.f32.gmra.mrb[0].mxu0 %v760
    %v762 = vpop.f32.mrb[0].mxu0
    %v763 = vadd.f32 %v616, %v762
    %v764 = vpop.f32.mrb[0].mxu0
    %765 = vmatprep.mubr.f32.mxu0 0.0
    %v766 = vand.u32 %v74, 4294901760
    %767 = vmatmul.mubr.f32.gmra.mrb[0].mxu0 %v766
    %v768 = vpop.f32.mrb[0].mxu0
    %v769 = vadd.f32 %v624, %v768
    %v770 = vpop.f32.mrb[0].mxu0
    %771 = vmatprep.mubr.f32.mxu0 0.0
    %v772 = vand.u32 %v75, 4294901760
    %773 = vmatmul.mubr.f32.gmra.mrb[0].mxu0 %v772
    %v774 = vpop.f32.mrb[0].mxu0
    %v775 = vadd.f32 %v632, %v774
    %v776 = vpop.f32.mrb[0].mxu0
    %777 = vdwg.mxu0
    %778 = vmatprep.subr.mxu0 0.0
    %v779 = vand.u32 %v15, 4294901760
    %780 = vmatpush1.msra.mxu0 %v779
    %781 = vmatprep.subr.mxu0 0.0
    %v782 = vand.u32 %v16, 4294901760
    %783 = vmatpush1.msra.mxu0 %v782
    %784 = vmatprep.subr.mxu0 0.0
    %v785 = vand.u32 %v17, 4294901760
    %786 = vmatpush1.msra.mxu0 %v785
    %787 = vmatprep.subr.mxu0 0.0
    %v788 = vand.u32 %v18, 4294901760
    %789 = vmatpush1.msra.mxu0 %v788
    %790 = vmatprep.subr.mxu0 0.0
    %v791 = vand.u32 %v19, 4294901760
    %792 = vmatpush1.msra.mxu0 %v791
    %793 = vmatprep.subr.mxu0 0.0
    %v794 = vand.u32 %v20, 4294901760
    %795 = vmatpush1.msra.mxu0 %v794
    %796 = vmatprep.subr.mxu0 0.0
    %v797 = vand.u32 %v21, 4294901760
    %798 = vmatpush1.msra.mxu0 %v797
    %799 = vmatprep.subr.mxu0 0.0
    %v800 = vand.u32 %v22, 4294901760
    %801 = vmatpush1.msra.mxu0 %v800
    %802 = vmatprep.subr.mxu0 0.0
    %v803 = vand.u32 %v23, 4294901760
    %804 = vmatpush1.msra.mxu0 %v803
    %805 = vmatprep.subr.mxu0 0.0
    %v806 = vand.u32 %v24, 4294901760
    %807 = vmatpush1.msra.mxu0 %v806
    %808 = vmatprep.subr.mxu0 0.0
    %v809 = vand.u32 %v25, 4294901760
    %810 = vmatpush1.msra.mxu0 %v809
    %811 = vmatprep.subr.mxu0 0.0
    %v812 = vand.u32 %v26, 4294901760
    %813 = vmatpush1.msra.mxu0 %v812
    %814 = vmatprep.subr.mxu0 0.0
    %v815 = vand.u32 %v27, 4294901760
    %816 = vmatpush1.msra.mxu0 %v815
    %817 = vmatprep.subr.mxu0 0.0
    %v818 = vand.u32 %v28, 4294901760
    %819 = vmatpush1.msra.mxu0 %v818
    %820 = vmatprep.subr.mxu0 0.0
    %v821 = vand.u32 %v29, 4294901760
    %822 = vmatpush1.msra.mxu0 %v821
    %823 = vmatprep.subr.mxu0 0.0
    %v824 = vand.u32 %v30, 4294901760
    %825 = vmatpush1.msra.mxu0 %v824
    %826 = vmatprep.subr.mxu0 0.0
    %827 = vmatpush1.msra.mxu0 0.0
    %828 = vmatprep.subr.mxu0 0.0
    %829 = vmatpush1.msra.mxu0 0.0
    %830 = vmatprep.subr.mxu0 0.0
    %831 = vmatpush1.msra.mxu0 0.0
    %832 = vmatprep.subr.mxu0 0.0
    %833 = vmatpush1.msra.mxu0 0.0
    %834 = vmatprep.subr.mxu0 0.0
    %835 = vmatpush1.msra.mxu0 0.0
    %836 = vmatprep.subr.mxu0 0.0
    %837 = vmatpush1.msra.mxu0 0.0
    %838 = vmatprep.subr.mxu0 0.0
    %839 = vmatpush1.msra.mxu0 0.0
    %840 = vmatprep.subr.mxu0 0.0
    %841 = vmatpush1.msra.mxu0 0.0
    %842 = vmatprep.subr.mxu0 0.0
    %843 = vmatpush1.msra.mxu0 0.0
    %844 = vmatprep.subr.mxu0 0.0
    %845 = vmatpush1.msra.mxu0 0.0
    %846 = vmatprep.subr.mxu0 0.0
    %847 = vmatpush1.msra.mxu0 0.0
    %848 = vmatprep.subr.mxu0 0.0
    %849 = vmatpush1.msra.mxu0 0.0
    %850 = vmatprep.subr.mxu0 0.0
    %851 = vmatpush1.msra.mxu0 0.0
    %852 = vmatprep.subr.mxu0 0.0
    %853 = vmatpush1.msra.mxu0 0.0
    %854 = vmatprep.subr.mxu0 0.0
    %855 = vmatpush1.msra.mxu0 0.0
    %856 = vmatprep.subr.mxu0 0.0
    %857 = vmatpush1.msra.mxu0 0.0
    %858 = vmatprep.mubr.f32.mxu0 0.0
    %v859 = vand.u32 %v71, 4294901760
    %860 = vmatmul.mubr.f32.gmra.mrb[0].mxu0 %v859
    %v861 = vpop.f32.mrb[0].mxu0
    %v862 = vadd.f32 %v751, %v861
    %v863 = vpop.f32.mrb[0].mxu0
    %864 = vmatprep.mubr.f32.mxu0 0.0
    %v865 = vand.u32 %v72, 4294901760
    %866 = vmatmul.mubr.f32.gmra.mrb[0].mxu0 %v865
    %v867 = vpop.f32.mrb[0].mxu0
    %v868 = vadd.f32 %v757, %v867
    %v869 = vpop.f32.mrb[0].mxu0
    %870 = vmatprep.mubr.f32.mxu0 0.0
    %v871 = vand.u32 %v73, 4294901760
    %872 = vmatmul.mubr.f32.gmra.mrb[0].mxu0 %v871
    %v873 = vpop.f32.mrb[0].mxu0
    %v874 = vadd.f32 %v763, %v873
    %v875 = vpop.f32.mrb[0].mxu0
    %876 = vmatprep.mubr.f32.mxu0 0.0
    %v877 = vand.u32 %v74, 4294901760
    %878 = vmatmul.mubr.f32.gmra.mrb[0].mxu0 %v877
    %v879 = vpop.f32.mrb[0].mxu0
    %v880 = vadd.f32 %v769, %v879
    %v881 = vpop.f32.mrb[0].mxu0
    %882 = vmatprep.mubr.f32.mxu0 0.0
    %v883 = vand.u32 %v75, 4294901760
    %884 = vmatmul.mubr.f32.gmra.mrb[0].mxu0 %v883
    %v885 = vpop.f32.mrb[0].mxu0
    %v886 = vadd.f32 %v775, %v885
    %v887 = vpop.f32.mrb[0].mxu0
    %888 = vdwg.mxu0
    %v892 = vrot.slane %v874, 4
    %v893 = vrot.slane %v880, 4
    %v894 = vsel %vm31, %v892, %v893
    %v895 = vrot.slane %v886, 4
    %v896 = vsel %vm31, %v893, %v895
    %897 = vrot.lane.b32.xlu0 %v894, 100
    %v898 = vpop.permute.xlu0 %897
    %899 = vrot.lane.b32.xlu0 %v896, 100
    %v900 = vpop.permute.xlu0 %899
    %901 = vrot.lane.b32.xlu0 %v895, 100
    %v902 = vpop.permute.xlu0 %901
    %vm906 = vcmask 818176
    %v907 = vsel %vm906, %v862, %v898
    %v908 = vsel %vm906, %v868, %v900
    %v909 = vsel %vm906, %v874, %v902
    %910 = vst [vmem:[#allocation2] sm:$0xff] %v907
    %vm911 = vcmask 588800
    %912 = vst.msk [vmem:[#allocation2 + $0x8] sm:$0xff] %vm911, %v898
    %913 = vst [vmem:[#allocation2 + $0x10] sm:$0xff] %v908
    %914 = vst.msk [vmem:[#allocation2 + $0x18] sm:$0xff] %vm911, %v900
    %915 = vst [vmem:[#allocation2 + $0x20] sm:$0xf] %v909
    %vm916 = vcmask 584704
    %917 = vst.msk [vmem:[#allocation2 + $0x28] sm:$0xf] %vm916, %v902
    // Predicated region
    $region10: #{word_emb.1} parent=1 // pred_check
      _
    $region11: #{word_emb.1} parent=1 // pred_check_branch
      %919 = sbr.rel (0) target = $region13
    $region12: #{word_emb.1} parent=1 // pred_region
      %s921 = ssub.s32 768, 768
      %922 = vsyncadd [#allocation3], %s921
      %s923 = sshll.u32 [#allocation2], 4
      %s924 = int_to_ptr.vmem [resolvable:$true] %s923
      %929 = dma.vmem_to_hbm [thread:$0]  %s924, 768, %s2, [#allocation3], 256, 256, 16
    $region13: #{word_emb.1} parent=1 // pred_fallthru
      _
    // Predicated region
    $region14: #{word_emb.1} parent=1 // pred_check
      _
    $region15: #{word_emb.1} parent=1 // pred_check_branch
      %931 = sbr.rel (0) target = $region17
    $region16: #{word_emb.1} parent=1 // pred_region
      %932 = dma.done [#allocation3], 768
    $region17: #{word_emb.1} parent=1 // pred_fallthru
      _
    %933 = vsyncpa [#allocation3], 1

</llo_original>
